<compile_context>
chip_gen: v7x
topology: tpu7x:2x2x1
jax: 0.10.0
libtpu: 0.0.40
codegen_flags: <defaults>
</compile_context>

<pallas_src>
import jax
import jax.numpy as jnp
from jax.experimental import pallas as pl
from jax.experimental.pallas import tpu as pltpu


def _prune_kernel(x_ref, mask_ref, o_ref):
    # Pure VPU elementwise multiply; the int8 -> x.dtype cast is a cheap VPU
    # convert that keeps mask HBM reads at 1 byte per element.
    o_ref[...] = x_ref[...] * mask_ref[...].astype(x_ref.dtype)


# Minimum sublane (second-to-last) tile granularity per element size.
_SUBLANE = {4: 8, 2: 16, 1: 32}
_LANE_CANDIDATES = (4096, 2048, 1024, 512, 256, 128)


def _round_up(a: int, b: int) -> int:
    return -(-a // b) * b


def _sublane(dtype) -> int:
    return _SUBLANE.get(jnp.dtype(dtype).itemsize, 8)


def _choose_lanes(total: int):
    """Largest lane width (multiple of 128) that evenly factors `total`."""
    for ln in _LANE_CANDIDATES:
        if total % ln == 0:
            return ln
    return None


def pruning_forward(x: jax.Array, mask: jax.Array, *,
                    tile_m: int = 512, tile_n: int = 1024,
                    min_pallas_elements: int = 16384,
                    donate_x: bool = False) -> jax.Array:
    """Pallas implementation of PruningParametrization.forward: x * mask.

    x    : float tensor of any rank.
    mask : {0, 1} tensor of the same shape (int8 recommended).
    Tensors with fewer than `min_pallas_elements` elements use a plain fused
    XLA multiply (kernel launch overhead would dominate).
    """
    assert x.shape == mask.shape, "mask must have the same shape as x"
    orig_shape = x.shape
    total = x.size

    # Tiny tensors (e.g. the (3,3) Linear weight): let XLA fuse the multiply
    # into the consumer instead of paying a kernel launch.
    if total < min_pallas_elements:
        return x * mask.astype(x.dtype)

    # ---- Build a lane-dense 2D slab (flatten is a free contiguous reshape). ----
    xf = x.reshape(-1)
    mf = mask.reshape(-1)
    lanes = _choose_lanes(total)
    pad = 0
    if lanes is None:
        # Flat size not a multiple of 128: pad once to a 1024-lane slab.
        lanes = 1024
        padded = _round_up(total, lanes)
        pad = padded - total
        xf = jnp.pad(xf, (0, pad))
        mf = jnp.pad(mf, (0, pad))
    M = xf.size // lanes
    N = lanes
    x2 = xf.reshape(M, N)
    m2 = mf.reshape(M, N)

    # ---- Tile sizing: block shape keeps (sublane, 128) divisibility; the
    # array itself may be ragged (cdiv grid handles edge blocks). ----
    sub = max(_sublane(x2.dtype), _sublane(m2.dtype))
    if M <= sub:
        tm = M                                   # full-dim block (allowed)
    else:
        tm = min(_round_up(tile_m, sub), _round_up(M, sub))
    tn = min(_round_up(tile_n, 128), N)

    # Keep double-buffered live VMEM <= ~24 MiB so the same defaults fit
    # v7x (32 MiB scoped / 64 MiB physical) as well as v5e/v6e (128 MiB).
    bytes_per_elem = 2 * x2.dtype.itemsize + m2.dtype.itemsize  # x + out + mask
    max_live = 24 * 1024 * 1024
    while 2 * tm * tn * bytes_per_elem > max_live and tn > 128:
        tn = max(128, _round_up(tn // 2, 128))
    while 2 * tm * tn * bytes_per_elem > max_live and tm > sub:
        tm = max(sub, _round_up(tm // 2, sub))

    grid_m = pl.cdiv(M, tm)
    grid_n = pl.cdiv(N, tn)
    # v7x has two TensorCores (each with its own HBM path): make sure any
    # tensor that reaches Pallas has >= 2 grid steps on a parallel axis.
    if grid_m * grid_n == 1:
        if N >= 256:
            tn = _round_up(pl.cdiv(N, 2), 128)
        elif M > sub:
            tm = max(sub, _round_up(pl.cdiv(M, 2), sub))
        grid_m = pl.cdiv(M, tm)
        grid_n = pl.cdiv(N, tn)

    spec = pl.BlockSpec((tm, tn), lambda i, j: (i, j))
    out = pl.pallas_call(
        _prune_kernel,
        out_shape=jax.ShapeDtypeStruct((M, N), x2.dtype),
        grid=(grid_m, grid_n),
        in_specs=[spec, spec],
        out_specs=spec,
        # Footprint-only optimization (bandwidth is unchanged).
        input_output_aliases={0: 0} if donate_x else {},
        compiler_params=pltpu.CompilerParams(
            dimension_semantics=("parallel", "parallel"),
            vmem_limit_bytes=32 * 1024 * 1024,
        ),
    )(x2, m2)

    out = out.reshape(-1)
    if pad:
        out = out[:total]
    return out.reshape(orig_shape)


class PruningParametrization:
    """JAX/Pallas port of the PyTorch PruningParametrization module."""

    # TODO(synk): torch.nn.utils.parametrize registration has no Pallas
    # equivalent; only the mask sampling + forward multiply are implemented.

    def __init__(self, x: jax.Array, p_drop: float = 0.2, *, key: jax.Array,
                 mask_dtype=jnp.int8):
        # torch.bernoulli(full_like(x, 1 - p_drop)) -> fixed {0,1} mask,
        # stored narrow (int8) to minimize HBM read traffic in forward.
        keep_prob = 1.0 - p_drop
        self.mask = jax.random.bernoulli(
            key, p=keep_prob, shape=x.shape).astype(mask_dtype)

    def __call__(self, x: jax.Array) -> jax.Array:
        return pruning_forward(x, self.mask)

    def right_inverse(self, a: jax.Array) -> jax.Array:
        # Identity, as in the PyTorch module.
        return a

    def folded_weight(self, x: jax.Array) -> jax.Array:
        """Fold the fixed mask into the weight once (recommended for inference)."""
        return pruning_forward(x, self.mask)


if __name__ == "__main__":
    key = jax.random.PRNGKey(0)
    k1, k2, k3, k4, k5, k6 = jax.random.split(key, 6)

    # --- Case 1: exact module shape — nn.Linear(3, 3).weight -> (3, 3). ---
    # Tiny, so it takes the XLA-fused path (kernel launch would be pure overhead).
    x_small = jax.random.uniform(k1, (3, 3), dtype=jnp.float32)
    p_small = PruningParametrization(x_small, p_drop=0.2, key=k2)
    y_small = jax.block_until_ready(p_small(x_small))
    ref_small = x_small * p_small.mask.astype(x_small.dtype)
    assert y_small.shape == x_small.shape and y_small.dtype == x_small.dtype
    assert jnp.allclose(y_small, ref_small), "mismatch (3,3)"
    assert jnp.allclose(p_small.right_inverse(x_small), x_small)

    # --- Case 2: larger pruned weight — lane-dense tiled Pallas path. ---
    x_big = jax.random.uniform(k3, (256, 512), dtype=jnp.float32)
    p_big = PruningParametrization(x_big, p_drop=0.5, key=k4)
    ref_big = x_big * p_big.mask.astype(x_big.dtype)
    y_big = jax.block_until_ready(
        pruning_forward(x_big, p_big.mask, min_pallas_elements=1))
    assert jnp.allclose(y_big, ref_big), "mismatch (tiled Pallas path)"

    # --- Case 3: ragged shape whose flat size is not a multiple of 128 —
    # exercises the flatten + pad-to-lane-dense fallback. ---
    x_rag = jax.random.uniform(k5, (37, 129), dtype=jnp.float32)
    p_rag = PruningParametrization(x_rag, p_drop=0.3, key=k6)
    ref_rag = x_rag * p_rag.mask.astype(x_rag.dtype)
    y_rag = jax.block_until_ready(
        pruning_forward(x_rag, p_rag.mask, min_pallas_elements=1))
    assert jnp.allclose(y_rag, ref_rag), "mismatch (padded lane-dense path)"

    # Folded (inference) weight matches too.
    assert jnp.allclose(
        pruning_forward(x_big, p_big.mask, min_pallas_elements=1), ref_big)

    print("KERNEL_OK")
</pallas_src>

<mosaic_0001>
module attributes {stable_mosaic.version = 11 : i64} {
  func.func @_prune_kernel(%arg0: i32, %arg1: i32, %arg2: memref<32x1024xf32, #tpu.memory_space<vmem>>, %arg3: memref<32x1024xi8, #tpu.memory_space<vmem>>, %arg4: memref<32x1024xf32, #tpu.memory_space<vmem>>) attributes {dimension_semantics = [#tpu.dimension_semantics<parallel>, #tpu.dimension_semantics<parallel>], iteration_bounds = array<i64: 1, 4>, scalar_prefetch = 0 : i64, scratch_operands = 0 : i64, tpu.core_type = #tpu.core_type<tc>, window_params = [{transform_indices = @transform_0, window_bounds = array<i64: 32, 1024>}, {transform_indices = @transform_1, window_bounds = array<i64: 32, 1024>}, {transform_indices = @transform_2, window_bounds = array<i64: 32, 1024>}]} {
    %c0 = arith.constant 0 : index
    %c0_0 = arith.constant 0 : index
    %0 = vector.load %arg2[%c0, %c0_0] : memref<32x1024xf32, #tpu.memory_space<vmem>>, vector<32x1024xf32>
    %c0_1 = arith.constant 0 : index
    %c0_2 = arith.constant 0 : index
    %1 = vector.load %arg3[%c0_1, %c0_2] : memref<32x1024xi8, #tpu.memory_space<vmem>>, vector<32x1024xi8>
    %2 = arith.sitofp %1 : vector<32x1024xi8> to vector<32x1024xf32>
    %3 = arith.mulf %0, %2 : vector<32x1024xf32>
    %c0_3 = arith.constant 0 : index
    %c0_4 = arith.constant 0 : index
    %4 = vector.load %arg4[%c0_3, %c0_4] : memref<32x1024xf32, #tpu.memory_space<vmem>>, vector<32x1024xf32>
    tpu.vector_store %arg4[%c0_3, %c0_4], %3 {strides = array<i32>} : memref<32x1024xf32, #tpu.memory_space<vmem>>, vector<32x1024xf32>,
    return
  }
  func.func @transform_0(%arg0: i32, %arg1: i32) -> (i32, i32) {
    %c0_i32 = arith.constant 0 : i32
    return %arg0, %arg1 : i32, i32
  }
  func.func @transform_1(%arg0: i32, %arg1: i32) -> (i32, i32) {
    %c0_i32 = arith.constant 0 : i32
    return %arg0, %arg1 : i32, i32
  }
  func.func @transform_2(%arg0: i32, %arg1: i32) -> (i32, i32) {
    %c0_i32 = arith.constant 0 : i32
    return %arg0, %arg1 : i32, i32
  }
}

</mosaic_0001>

<llo_original>
// kernel: tpu_custom_call.1
$region0: #{tpu_custom_call.1}
  #allocation0 [shape = 'u32[]', space=smem, size = 0x4, offset = 0x4, fixed_abs, tag = 'smem constant byte address 0x4 - core index']
  #allocation1 [shape = 'u32[144,128]{1,0:T(1,128)}', space=vmem, size = 0x12000, scoped, tag = 'internal scratch']
  %s0 = inlined_call_operand.hbm [shape: f32[32,4096], index: 0, kind: input, shape index: {}]
  %s1 = inlined_call_operand.hbm [shape: s8[32,4096], index: 1, kind: input, shape index: {}]
  %s2 = inlined_call_operand.hbm [shape: f32[32,4096], index: 2, kind: output, shape index: {}]
  %s3 = sld [smem:[#allocation0]]
  $region49: #{tpu_custom_call.1} parent=0
    _
  %s5 = ssub.s32 1, %s3
  %s6 = scalar_select 0, %s5, %s3
  $region1: #{tpu_custom_call.1} parent=0
    #allocation2 [shape = 'u8[262144]{0}', space=vmem, size = 0x40000, scoped, tag = 'input window, operand 0']
    #allocation3 [shape = 's32[2]{0}', space=sflag, size = 0x8, scoped, tag = 'scoped memory for tpu_custom_call.1']
    #allocation4 [shape = 's32[2]{0}', space=sflag, size = 0x8, scoped, tag = 'scoped memory for tpu_custom_call.1']
    #allocation5 [shape = 'u8[65536]{0}', space=vmem, size = 0x10000, scoped, tag = 'input window, operand 1']
    #allocation6 [shape = 's32[2]{0}', space=sflag, size = 0x8, scoped, tag = 'scoped memory for tpu_custom_call.1']
    #allocation7 [shape = 'u8[262144]{0}', space=vmem, size = 0x40000, scoped, tag = 'output window, operand 0']
    %7 = vsyncpa [#allocation3], 0
    %s8 = scalar_lea.sflag [#allocation3], 1
    %9 = vsyncpa %s8, 0
    %10 = vsyncpa [#allocation6], 0
    %s11 = scalar_lea.sflag [#allocation6], 1
    %12 = vsyncpa %s11, 0
    %13 = vsyncpa [#allocation4], 0
    %s14 = scalar_lea.sflag [#allocation4], 1
    %15 = vsyncpa %s14, 0
    loop: start=0, step=1, limit=6
    $region2: #{tpu_custom_call.1} parent=1 // loop_pre_header
      _
    $region3: #{tpu_custom_call.1} parent=1 // loop_header
      %s17 = sphi 0, %s21
      %p18 = scmp.ge.s32.totalorder %s17, 6
      %s24 = sphi 0, %s36
      %s25 = sphi 0, %s32
      %s26 = sphi 0, %s24
      %s27 = sphi 0, %s25
      %s28 = sphi 0, %s26
      %s29 = sphi 0, %s27
      %s41 = sphi 0, %s43
      %s44 = sphi 0, %s41
      %s45 = sphi 0, %s44
      %s61 = sphi 0, %s45
      %s69 = sphi 0, %s71
      %s72 = sphi 0, %s69
      %s73 = sphi 0, %s72
      %s89 = sphi 0, %s73
      %s97 = sphi 0, %s99
      %s100 = sphi 0, %s97
      %s101 = sphi 0, %s100
      %s117 = sphi 0, %s101
    $region4: #{tpu_custom_call.1} parent=1 // loop_header_branch
      %20 = sbr.rel (%p18) target = $region8
    $region5: #{tpu_custom_call.1} parent=1 // loop_body
      %s22 = ssub.s32 %s17, 1
      %s23 = ssub.s32 %s17, 2
      %s30 = sadd.s32 1, %s25
      %p31 = scmp.ge.s32.totalorder %s30, 4
      %s32 = scalar_select %p31, 0, %s30
      %s33 = sadd.s32 1, %s24
      %s34 = scalar_select %p31, %s33, %s24
      %p35 = scmp.ge.s32.totalorder %s34, 1
      %s36 = scalar_select %p35, 0, %s34
      %s37 = ssub.s32 %s24, %s36
      %s38 = ssub.s32 %s25, %s32
      %s39 = sor.u32 %s37, %s38
      %p40 = scmp.eq.s32.totalorder %s39, 0
      %s42 = sadd.s32 %s41, 1
      %s43 = scalar_select %p40, %s41, %s42
      %p46 = pneg %p40
      %p47 = scmp.eq.s32.totalorder %s17, 3
      %p48 = por %p46, %p47
      %p49 = scmp.ne.s32.totalorder %s41, %s44
      %p50 = scmp.eq.s32.totalorder %s17, 0
      %p51 = por %p49, %p50
      %p52 = scmp.ne.s32.totalorder %s41, %s44
      %p53 = scmp.eq.s32.totalorder %s22, 3
      %p54 = por %p52, %p53
      %p55 = scmp.ne.s32.totalorder %s44, %s45
      %p56 = scmp.eq.s32.totalorder %s22, 0
      %p57 = por %p55, %p56
      %p58 = scmp.ne.s32.totalorder %s44, %s45
      %p59 = scmp.eq.s32.totalorder %s23, 3
      %p60 = por %p58, %p59
      %p62 = scmp.ne.s32.totalorder %s45, %s61
      %p63 = scmp.eq.s32.totalorder %s23, 0
      %p64 = por %p62, %p63
      %s65 = ssub.s32 %s24, %s36
      %s66 = ssub.s32 %s25, %s32
      %s67 = sor.u32 %s65, %s66
      %p68 = scmp.eq.s32.totalorder %s67, 0
      %s70 = sadd.s32 %s69, 1
      %s71 = scalar_select %p68, %s69, %s70
      %p74 = pneg %p68
      %p75 = scmp.eq.s32.totalorder %s17, 3
      %p76 = por %p74, %p75
      %p77 = scmp.ne.s32.totalorder %s69, %s72
      %p78 = scmp.eq.s32.totalorder %s17, 0
      %p79 = por %p77, %p78
      %p80 = scmp.ne.s32.totalorder %s69, %s72
      %p81 = scmp.eq.s32.totalorder %s22, 3
      %p82 = por %p80, %p81
      %p83 = scmp.ne.s32.totalorder %s72, %s73
      %p84 = scmp.eq.s32.totalorder %s22, 0
      %p85 = por %p83, %p84
      %p86 = scmp.ne.s32.totalorder %s72, %s73
      %p87 = scmp.eq.s32.totalorder %s23, 3
      %p88 = por %p86, %p87
      %p90 = scmp.ne.s32.totalorder %s73, %s89
      %p91 = scmp.eq.s32.totalorder %s23, 0
      %p92 = por %p90, %p91
      %s93 = ssub.s32 %s24, %s36
      %s94 = ssub.s32 %s25, %s32
      %s95 = sor.u32 %s93, %s94
      %p96 = scmp.eq.s32.totalorder %s95, 0
      %s98 = sadd.s32 %s97, 1
      %s99 = scalar_select %p96, %s97, %s98
      %p102 = pneg %p96
      %p103 = scmp.eq.s32.totalorder %s17, 3
      %p104 = por %p102, %p103
      %p105 = scmp.ne.s32.totalorder %s97, %s100
      %p106 = scmp.eq.s32.totalorder %s17, 0
      %p107 = por %p105, %p106
      %p108 = scmp.ne.s32.totalorder %s97, %s100
      %p109 = scmp.eq.s32.totalorder %s22, 3
      %p110 = por %p108, %p109
      %p111 = scmp.ne.s32.totalorder %s100, %s101
      %p112 = scmp.eq.s32.totalorder %s22, 0
      %p113 = por %p111, %p112
      %p114 = scmp.ne.s32.totalorder %s100, %s101
      %p115 = scmp.eq.s32.totalorder %s23, 3
      %p116 = por %p114, %p115
      %p118 = scmp.ne.s32.totalorder %s101, %s117
      %p119 = scmp.eq.s32.totalorder %s23, 0
      %p120 = por %p118, %p119
      %p121 = scmp.le.s32.totalorder 1, %s17
      %p122 = scmp.lt.s32.totalorder %s17, 5
      %p123 = pnand %p121, %p122
      %p124 = pneg %p123
      // Predicated region
      $region9: #{tpu_custom_call.1} parent=5 // pred_check
        _
      $region10: #{tpu_custom_call.1} parent=5 // pred_check_branch
        %126 = sbr.rel (%p123) target = $region12
      $region11: #{tpu_custom_call.1} parent=5 // pred_region
        %s127 = ssub.s32 %s17, 1
      $region12: #{tpu_custom_call.1} parent=5 // pred_fallthru
        _
      %p128 = scmp.lt.s32.totalorder %s17, 4
      // Predicated region
      $region13: #{tpu_custom_call.1} parent=5 // pred_check
        %p129 = pneg %p128
      $region14: #{tpu_custom_call.1} parent=5 // pred_check_branch
        %131 = sbr.rel (%p129) target = $region16
      $region15: #{tpu_custom_call.1} parent=5 // pred_region
        // Predicated region
        $region17: #{tpu_custom_call.1} parent=15 // pred_check
          %p132 = pneg %p51
        $region18: #{tpu_custom_call.1} parent=15 // pred_check_branch
          %134 = sbr.rel (%p132) target = $region20
        $region19: #{tpu_custom_call.1} parent=15 // pred_region
          %s135 = sand.u32 %s41, 1
          %s136 = scalar_lea.sflag [#allocation3], %s135
          %s137 = sand.u32 %s41, 1
          %s138 = smul.addr %s137, 256
          %s139 = scalar_lea.vmem [#allocation2], %s138
          %s140 = smul.u32 4, %s24
          %s141 = smul.u32 8, %s25
          %s143 = ssub.s32 4096, 4096
          %144 = vsyncadd %s136, %s143
          %s145 = smul.addr %s140, 32
          %s146 = sadd.s32 %s141, %s145
          %s147 = smul.addr %s146, 128
          %s148 = scalar_lea.hbm %s0, %s147
          %s149 = sshll.u32 %s139, 4
          %s150 = int_to_ptr.vmem [resolvable:$true] %s149
          %155 = dma.hbm_to_vmem [thread:$0]  %s148, 4096, %s150, %s136, 4096, 1024, 64
        $region20: #{tpu_custom_call.1} parent=15 // pred_fallthru
          _
        // Predicated region
        $region21: #{tpu_custom_call.1} parent=15 // pred_check
          %p156 = pneg %p79
        $region22: #{tpu_custom_call.1} parent=15 // pred_check_branch
          %158 = sbr.rel (%p156) target = $region24
        $region23: #{tpu_custom_call.1} parent=15 // pred_region
          %s159 = sand.u32 %s69, 1
          %s160 = scalar_lea.sflag [#allocation6], %s159
          %s161 = sand.u32 %s69, 1
          %s162 = smul.addr %s161, 64
          %s163 = scalar_lea.vmem [#allocation5], %s162
          %s164 = smul.u32 8, %s25
          %s166 = ssub.s32 1024, 1024
          %167 = vsyncadd %s160, %s166
          %s168 = smul.addr %s24, 32
          %s169 = sadd.s32 %s164, %s168
          %s170 = smul.addr %s169, 128
          %s171 = scalar_lea.hbm %s1, %s170
          %s173 = sshll.u32 %s163, 4
          %s174 = int_to_ptr.vmem [resolvable:$true] %s173
          %176 = dma.hbm_to_vmem [thread:$0]  %s171, 1024, %s174, %s160
        $region24: #{tpu_custom_call.1} parent=15 // pred_fallthru
          _
      $region16: #{tpu_custom_call.1} parent=5 // pred_fallthru
        _
      %p177 = scmp.le.s32.totalorder 1, %s17
      %p178 = scmp.lt.s32.totalorder %s17, 5
      %p179 = pnand %p177, %p178
      %p180 = pneg %p179
      // Predicated region
      $region25: #{tpu_custom_call.1} parent=5 // pred_check
        _
      $region26: #{tpu_custom_call.1} parent=5 // pred_check_branch
        %182 = sbr.rel (%p179) target = $region28
      $region27: #{tpu_custom_call.1} parent=5 // pred_region
        %s183 = ssub.s32 %s17, 1
        %s184 = sand.u32 %s44, 1
        %s185 = scalar_lea.sflag [#allocation3], %s184
        %s186 = sand.u32 %s44, 1
        %s187 = smul.addr %s186, 256
        %s188 = scalar_lea.vmem [#allocation2], %s187
        // Predicated region
        $region29: #{tpu_custom_call.1} parent=27 // pred_check
          %p189 = pneg %p57
        $region30: #{tpu_custom_call.1} parent=27 // pred_check_branch
          %191 = sbr.rel (%p189) target = $region32
        $region31: #{tpu_custom_call.1} parent=27 // pred_region
          %192 = dma.done %s185, 4096
        $region32: #{tpu_custom_call.1} parent=27 // pred_fallthru
          _
        %s193 = sand.u32 %s72, 1
        %s194 = scalar_lea.sflag [#allocation6], %s193
        %s195 = sand.u32 %s72, 1
        %s196 = smul.addr %s195, 64
        %s197 = scalar_lea.vmem [#allocation5], %s196
        // Predicated region
        $region33: #{tpu_custom_call.1} parent=27 // pred_check
          %p198 = pneg %p85
        $region34: #{tpu_custom_call.1} parent=27 // pred_check_branch
          %200 = sbr.rel (%p198) target = $region36
        $region35: #{tpu_custom_call.1} parent=27 // pred_region
          %201 = dma.done %s194, 1024
        $region36: #{tpu_custom_call.1} parent=27 // pred_fallthru
          _
        %s202 = sand.u32 %s44, 1
        %s203 = scalar_lea.sflag [#allocation3], %s202
        %s204 = sand.u32 %s44, 1
        %s205 = smul.addr %s204, 256
        %s206 = scalar_lea.vmem [#allocation2], %s205
        %p207 = pneg %p57
        %p208 = pneg %p54
        %s209 = sand.u32 %s72, 1
        %s210 = scalar_lea.sflag [#allocation6], %s209
        %s211 = sand.u32 %s72, 1
        %s212 = smul.addr %s211, 64
        %s213 = scalar_lea.vmem [#allocation5], %s212
        %p214 = pneg %p85
        %p215 = pneg %p82
        %p216 = pneg %p113
        %p217 = pneg %p110
        %s218 = sand.u32 %s100, 1
        %s219 = scalar_lea.sflag [#allocation4], %s218
        %s220 = sand.u32 %s100, 1
        %s221 = smul.addr %s220, 256
        %s222 = scalar_lea.vmem [#allocation7], %s221
        %s223 = smul.u32 4, %s26
        %s224 = smul.u32 8, %s27
        %s225 = smul.u32 8, %s27
        %s226 = smul.u32 4, %s26
        %s227 = smul.u32 8, %s27
        %v228 = vld [vmem:[%s188] sm:$0xff]
        %v229 = vld [vmem:[%s188 + $0x8] sm:$0xff]
        %v230 = vld [vmem:[%s188 + $0x10] sm:$0xff]
        %v231 = vld [vmem:[%s188 + $0x18] sm:$0xff]
        %v232 = vld [vmem:[%s188 + $0x20] sm:$0xff]
        %v233 = vld [vmem:[%s188 + $0x28] sm:$0xff]
        %v234 = vld [vmem:[%s188 + $0x30] sm:$0xff]
        %v235 = vld [vmem:[%s188 + $0x38] sm:$0xff]
        %v236 = vld [vmem:[%s188 + $0x40] sm:$0xff]
        %v237 = vld [vmem:[%s188 + $0x48] sm:$0xff]
        %v238 = vld [vmem:[%s188 + $0x50] sm:$0xff]
        %v239 = vld [vmem:[%s188 + $0x58] sm:$0xff]
        %v240 = vld [vmem:[%s188 + $0x60] sm:$0xff]
        %v241 = vld [vmem:[%s188 + $0x68] sm:$0xff]
        %v242 = vld [vmem:[%s188 + $0x70] sm:$0xff]
        %v243 = vld [vmem:[%s188 + $0x78] sm:$0xff]
        %v244 = vld [vmem:[%s188 + $0x80] sm:$0xff]
        %v245 = vld [vmem:[%s188 + $0x88] sm:$0xff]
        %v246 = vld [vmem:[%s188 + $0x90] sm:$0xff]
        %v247 = vld [vmem:[%s188 + $0x98] sm:$0xff]
        %v248 = vld [vmem:[%s188 + $0xa0] sm:$0xff]
        %v249 = vld [vmem:[%s188 + $0xa8] sm:$0xff]
        %v250 = vld [vmem:[%s188 + $0xb0] sm:$0xff]
        %v251 = vld [vmem:[%s188 + $0xb8] sm:$0xff]
        %v252 = vld [vmem:[%s188 + $0xc0] sm:$0xff]
        %v253 = vld [vmem:[%s188 + $0xc8] sm:$0xff]
        %v254 = vld [vmem:[%s188 + $0xd0] sm:$0xff]
        %v255 = vld [vmem:[%s188 + $0xd8] sm:$0xff]
        %v256 = vld [vmem:[%s188 + $0xe0] sm:$0xff]
        %v257 = vld [vmem:[%s188 + $0xe8] sm:$0xff]
        %v258 = vld [vmem:[%s188 + $0xf0] sm:$0xff]
        %v259 = vld [vmem:[%s188 + $0xf8] sm:$0xff]
        %v260 = vld [vmem:[%s197] sm:$0xff]
        %v261 = vld [vmem:[%s197 + $0x8] sm:$0xff]
        %v262 = vld [vmem:[%s197 + $0x10] sm:$0xff]
        %v263 = vld [vmem:[%s197 + $0x18] sm:$0xff]
        %v264 = vld [vmem:[%s197 + $0x20] sm:$0xff]
        %v265 = vld [vmem:[%s197 + $0x28] sm:$0xff]
        %v266 = vld [vmem:[%s197 + $0x30] sm:$0xff]
        %v267 = vld [vmem:[%s197 + $0x38] sm:$0xff]
        %v268 = vunpack.c.0.s8 %v260
        %v269 = vunpack.c.0.s8 %v261
        %v270 = vunpack.c.0.s8 %v262
        %v271 = vunpack.c.0.s8 %v263
        %v272 = vunpack.c.0.s8 %v264
        %v273 = vunpack.c.0.s8 %v265
        %v274 = vunpack.c.0.s8 %v266
        %v275 = vunpack.c.0.s8 %v267
        %v276 = vunpack.c.1.s8 %v260
        %v277 = vunpack.c.1.s8 %v261
        %v278 = vunpack.c.1.s8 %v262
        %v279 = vunpack.c.1.s8 %v263
        %v280 = vunpack.c.1.s8 %v264
        %v281 = vunpack.c.1.s8 %v265
        %v282 = vunpack.c.1.s8 %v266
        %v283 = vunpack.c.1.s8 %v267
        %v284 = vunpack.c.2.s8 %v260
        %v285 = vunpack.c.2.s8 %v261
        %v286 = vunpack.c.2.s8 %v262
        %v287 = vunpack.c.2.s8 %v263
        %v288 = vunpack.c.2.s8 %v264
        %v289 = vunpack.c.2.s8 %v265
        %v290 = vunpack.c.2.s8 %v266
        %v291 = vunpack.c.2.s8 %v267
        %v292 = vunpack.c.3.s8 %v260
        %v293 = vunpack.c.3.s8 %v261
        %v294 = vunpack.c.3.s8 %v262
        %v295 = vunpack.c.3.s8 %v263
        %v296 = vunpack.c.3.s8 %v264
        %v297 = vunpack.c.3.s8 %v265
        %v298 = vunpack.c.3.s8 %v266
        %v299 = vunpack.c.3.s8 %v267
        %v300 = vcvt.s32.f32 %v268
        %v301 = vcvt.s32.f32 %v269
        %v302 = vcvt.s32.f32 %v270
        %v303 = vcvt.s32.f32 %v271
        %v304 = vcvt.s32.f32 %v272
        %v305 = vcvt.s32.f32 %v273
        %v306 = vcvt.s32.f32 %v274
        %v307 = vcvt.s32.f32 %v275
        %v308 = vcvt.s32.f32 %v276
        %v309 = vcvt.s32.f32 %v277
        %v310 = vcvt.s32.f32 %v278
        %v311 = vcvt.s32.f32 %v279
        %v312 = vcvt.s32.f32 %v280
        %v313 = vcvt.s32.f32 %v281
        %v314 = vcvt.s32.f32 %v282
        %v315 = vcvt.s32.f32 %v283
        %v316 = vcvt.s32.f32 %v284
        %v317 = vcvt.s32.f32 %v285
        %v318 = vcvt.s32.f32 %v286
        %v319 = vcvt.s32.f32 %v287
        %v320 = vcvt.s32.f32 %v288
        %v321 = vcvt.s32.f32 %v289
        %v322 = vcvt.s32.f32 %v290
        %v323 = vcvt.s32.f32 %v291
        %v324 = vcvt.s32.f32 %v292
        %v325 = vcvt.s32.f32 %v293
        %v326 = vcvt.s32.f32 %v294
        %v327 = vcvt.s32.f32 %v295
        %v328 = vcvt.s32.f32 %v296
        %v329 = vcvt.s32.f32 %v297
        %v330 = vcvt.s32.f32 %v298
        %v331 = vcvt.s32.f32 %v299
        %v332 = vmul.f32 %v228, %v300
        %v333 = vmul.f32 %v229, %v301
        %v334 = vmul.f32 %v230, %v302
        %v335 = vmul.f32 %v231, %v303
        %v336 = vmul.f32 %v232, %v304
        %v337 = vmul.f32 %v233, %v305
        %v338 = vmul.f32 %v234, %v306
        %v339 = vmul.f32 %v235, %v307
        %v340 = vmul.f32 %v236, %v308
        %v341 = vmul.f32 %v237, %v309
        %v342 = vmul.f32 %v238, %v310
        %v343 = vmul.f32 %v239, %v311
        %v344 = vmul.f32 %v240, %v312
        %v345 = vmul.f32 %v241, %v313
        %v346 = vmul.f32 %v242, %v314
        %v347 = vmul.f32 %v243, %v315
        %v348 = vmul.f32 %v244, %v316
        %v349 = vmul.f32 %v245, %v317
        %v350 = vmul.f32 %v246, %v318
        %v351 = vmul.f32 %v247, %v319
        %v352 = vmul.f32 %v248, %v320
        %v353 = vmul.f32 %v249, %v321
        %v354 = vmul.f32 %v250, %v322
        %v355 = vmul.f32 %v251, %v323
        %v356 = vmul.f32 %v252, %v324
        %v357 = vmul.f32 %v253, %v325
        %v358 = vmul.f32 %v254, %v326
        %v359 = vmul.f32 %v255, %v327
        %v360 = vmul.f32 %v256, %v328
        %v361 = vmul.f32 %v257, %v329
        %v362 = vmul.f32 %v258, %v330
        %v363 = vmul.f32 %v259, %v331
        %364 = vst [vmem:[%s222] sm:$0xff] %v332
        %365 = vst [vmem:[%s222 + $0x8] sm:$0xff] %v333
        %366 = vst [vmem:[%s222 + $0x10] sm:$0xff] %v334
        %367 = vst [vmem:[%s222 + $0x18] sm:$0xff] %v335
        %368 = vst [vmem:[%s222 + $0x20] sm:$0xff] %v336
        %369 = vst [vmem:[%s222 + $0x28] sm:$0xff] %v337
        %370 = vst [vmem:[%s222 + $0x30] sm:$0xff] %v338
        %371 = vst [vmem:[%s222 + $0x38] sm:$0xff] %v339
        %372 = vst [vmem:[%s222 + $0x40] sm:$0xff] %v340
        %373 = vst [vmem:[%s222 + $0x48] sm:$0xff] %v341
        %374 = vst [vmem:[%s222 + $0x50] sm:$0xff] %v342
        %375 = vst [vmem:[%s222 + $0x58] sm:$0xff] %v343
        %376 = vst [vmem:[%s222 + $0x60] sm:$0xff] %v344
        %377 = vst [vmem:[%s222 + $0x68] sm:$0xff] %v345
        %378 = vst [vmem:[%s222 + $0x70] sm:$0xff] %v346
        %379 = vst [vmem:[%s222 + $0x78] sm:$0xff] %v347
        %380 = vst [vmem:[%s222 + $0x80] sm:$0xff] %v348
        %381 = vst [vmem:[%s222 + $0x88] sm:$0xff] %v349
        %382 = vst [vmem:[%s222 + $0x90] sm:$0xff] %v350
        %383 = vst [vmem:[%s222 + $0x98] sm:$0xff] %v351
        %384 = vst [vmem:[%s222 + $0xa0] sm:$0xff] %v352
        %385 = vst [vmem:[%s222 + $0xa8] sm:$0xff] %v353
        %386 = vst [vmem:[%s222 + $0xb0] sm:$0xff] %v354
        %387 = vst [vmem:[%s222 + $0xb8] sm:$0xff] %v355
        %388 = vst [vmem:[%s222 + $0xc0] sm:$0xff] %v356
        %389 = vst [vmem:[%s222 + $0xc8] sm:$0xff] %v357
        %390 = vst [vmem:[%s222 + $0xd0] sm:$0xff] %v358
        %391 = vst [vmem:[%s222 + $0xd8] sm:$0xff] %v359
        %392 = vst [vmem:[%s222 + $0xe0] sm:$0xff] %v360
        %393 = vst [vmem:[%s222 + $0xe8] sm:$0xff] %v361
        %394 = vst [vmem:[%s222 + $0xf0] sm:$0xff] %v362
        %395 = vst [vmem:[%s222 + $0xf8] sm:$0xff] %v363
        %s396 = sand.u32 %s100, 1
        %s397 = scalar_lea.sflag [#allocation4], %s396
        %s398 = sand.u32 %s100, 1
        %s399 = smul.addr %s398, 256
        %s400 = scalar_lea.vmem [#allocation7], %s399
        // Predicated region
        $region37: #{tpu_custom_call.1} parent=27 // pred_check
          %p401 = pneg %p110
        $region38: #{tpu_custom_call.1} parent=27 // pred_check_branch
          %403 = sbr.rel (%p401) target = $region40
        $region39: #{tpu_custom_call.1} parent=27 // pred_region
          %s404 = smul.u32 4, %s26
          %s405 = smul.u32 8, %s27
          %s407 = ssub.s32 4096, 4096
          %408 = vsyncadd %s397, %s407
          %s409 = smul.addr %s404, 32
          %s410 = sadd.s32 %s405, %s409
          %s411 = smul.addr %s410, 128
          %s412 = scalar_lea.hbm %s2, %s411
          %s413 = sshll.u32 %s400, 4
          %s414 = int_to_ptr.vmem [resolvable:$true] %s413
          %419 = dma.vmem_to_hbm [thread:$0]  %s414, 4096, %s412, %s397, 1024, 4096, 64
        $region40: #{tpu_custom_call.1} parent=27 // pred_fallthru
          _
      $region28: #{tpu_custom_call.1} parent=5 // pred_fallthru
        _
      %p420 = scmp.le.s32.totalorder 2, %s17
      // Predicated region
      $region41: #{tpu_custom_call.1} parent=5 // pred_check
        %p421 = pneg %p420
      $region42: #{tpu_custom_call.1} parent=5 // pred_check_branch
        %423 = sbr.rel (%p421) target = $region44
      $region43: #{tpu_custom_call.1} parent=5 // pred_region
        %s424 = ssub.s32 %s17, 2
        // Predicated region
        $region45: #{tpu_custom_call.1} parent=43 // pred_check
          %p425 = pneg %p116
        $region46: #{tpu_custom_call.1} parent=43 // pred_check_branch
          %427 = sbr.rel (%p425) target = $region48
        $region47: #{tpu_custom_call.1} parent=43 // pred_region
          %s428 = sand.u32 %s101, 1
          %s429 = scalar_lea.sflag [#allocation4], %s428
          %s430 = sand.u32 %s101, 1
          %s431 = smul.addr %s430, 256
          %s432 = scalar_lea.vmem [#allocation7], %s431
          %433 = dma.done %s429, 4096
        $region48: #{tpu_custom_call.1} parent=43 // pred_fallthru
          _
      $region44: #{tpu_custom_call.1} parent=5 // pred_fallthru
        _
    $region6: #{tpu_custom_call.1} parent=1 // loop_footer
      %s21 = sadd.s32 1, %s17
    $region7: #{tpu_custom_call.1} parent=1 // loop_footer_branch
      %16 = sbr.rel target = $region3
    $region8: #{tpu_custom_call.1} parent=1 // loop_exit
      _
    %434 = vsyncpa [#allocation3], 1
    %s435 = scalar_lea.sflag [#allocation3], 1
    %436 = vsyncpa %s435, 1
    %437 = vsyncpa [#allocation6], 1
    %s438 = scalar_lea.sflag [#allocation6], 1
    %439 = vsyncpa %s438, 1
    %440 = vsyncpa [#allocation4], 1
    %s441 = scalar_lea.sflag [#allocation4], 1
    %442 = vsyncpa %s441, 1

</llo_original>
